<compile_context>
chip_gen: v7x
topology: tpu7x:2x2x1
jax: 0.10.0
libtpu: 0.0.40
codegen_flags: <defaults>
</compile_context>

<pallas_src>
import jax
import jax.numpy as jnp
from jax import lax
from jax.experimental import pallas as pl
from jax.experimental.pallas import tpu as pltpu

block_size = 8
head_size = 16
n_embd = 32


def head_kernel(x_ref, wqkv_ref, bqkv_ref, o_ref):
    Bb, T, C = x_ref.shape
    H = wqkv_ref.shape[1] // 3

    # ---- fused QKV projection: one MXU pass over all rows of the block ----
    # (feed operands natively; f32 accumulation on the MXU)
    x2 = x_ref[...].reshape(Bb * T, C)                                # (Bb*T, C)
    qkv2 = jnp.dot(x2, wqkv_ref[...],
                   preferred_element_type=jnp.float32)                # (Bb*T, 3H)
    qkv2 = qkv2 + bqkv_ref[...].astype(jnp.float32)
    qkv = qkv2.reshape(Bb, T, 3 * H)                                  # (Bb, T, 3H)

    q = qkv[:, :, 0:H]
    k = qkv[:, :, H:2 * H]
    v = qkv[:, :, 2 * H:3 * H]

    # ---- attention scores: contract head dim of both operands (no k.T) ----
    # (verification item: confirm via bundle dump that Mosaic emits no vxpose;
    #  XLU slot is idle here either way.)
    scale = jnp.float32(H) ** jnp.float32(-0.5)
    wei = jnp.einsum('btd,bsd->bts', q, k,
                     preferred_element_type=jnp.float32) * scale      # (Bb, T, T)

    # ---- causal mask + softmax (finite fill; exp underflows to 0 exactly) ----
    row = lax.broadcasted_iota(jnp.int32, (T, T), 0)
    col = lax.broadcasted_iota(jnp.int32, (T, T), 1)
    causal = (col <= row)[None, :, :]                                 # (1, T, T)

    wei = jnp.where(causal, wei, jnp.float32(-1e30))
    wei = wei - jnp.max(wei, axis=-1, keepdims=True)
    p = jnp.exp(wei)
    denom = jnp.sum(p, axis=-1, keepdims=True)
    p = p / denom                    # exact normalization (matches reference)

    # ---- weighted sum of values ----
    out = jnp.einsum('bts,bsd->btd', p, v,
                     preferred_element_type=jnp.float32)              # (Bb, T, H)

    # Lane-dense store: collapse (T, H) -> T*H = 128 lanes so the output
    # store/writeback is a full-lane slab rather than 16-lane masked stores.
    o_ref[...] = out.reshape(Bb, T * H).astype(o_ref.dtype)


def fuse_qkv_params(wq, bq, wk, bk, wv, bv):
    """Fuse Q/K/V Linear params ONCE at init time (hoisted off the hot path)."""
    wqkv = jnp.concatenate([wq, wk, wv], axis=1)                      # (C, 3H)
    bqkv = jnp.concatenate([bq, bk, bv], axis=1)                      # (1, 3H)
    return wqkv, bqkv


def head_forward(x, wqkv, bqkv, *, batch_blocks=1):
    """Single-head causal self-attention (PyTorch `Head.forward`).

    batch_blocks=1 runs the whole (tiny, ~10 KB) working set in a single grid
    step — best at small B on v5e/v6e/v7x alike; the problem is fixed-overhead
    bound, so splitting it across v7x's two TensorCores only doubles launch and
    DMA overhead.  Only raise batch_blocks when B is large enough that each
    per-core block still carries hundreds of rows (~512-2048 rows-equivalent
    per step so BlockSpec double-buffering can overlap DMA with compute); for
    a guaranteed two-core split on v7x prefer pltpu.CORE_PARALLEL / pl.core_map
    over relying on plain "parallel".
    """
    B, T, C = x.shape
    H = wqkv.shape[1] // 3
    assert C == n_embd and T <= block_size
    assert B % batch_blocks == 0
    Bb = B // batch_blocks

    out2d = pl.pallas_call(
        head_kernel,
        out_shape=jax.ShapeDtypeStruct((B, T * H), x.dtype),
        grid_spec=pltpu.PrefetchScalarGridSpec(
            num_scalar_prefetch=0,
            grid=(batch_blocks,),
            in_specs=[
                pl.BlockSpec((Bb, T, C), lambda b: (b, 0, 0)),
                pl.BlockSpec((C, 3 * H), lambda b: (0, 0)),
                pl.BlockSpec((1, 3 * H), lambda b: (0, 0)),
            ],
            out_specs=pl.BlockSpec((Bb, T * H), lambda b: (b, 0)),
        ),
        compiler_params=pltpu.CompilerParams(
            dimension_semantics=("parallel",),
        ),
    )(x, wqkv, bqkv)

    # Wrapper-side reshape back to (B, T, H): contiguous, layout plumbing only.
    return out2d.reshape(B, T, H)


def head_reference(x, wq, bq, wk, bk, wv, bv):
    # Pure-JAX reference mirroring the PyTorch forward.
    q = x @ wq + bq
    k = x @ wk + bk
    v = x @ wv + bv
    wei = (q @ jnp.swapaxes(k, -2, -1)) * (head_size ** -0.5)
    T = x.shape[1]
    tril = jnp.tril(jnp.ones((T, T), dtype=bool))
    wei = jnp.where(tril, wei, -jnp.inf)
    wei = jax.nn.softmax(wei, axis=-1)
    return wei @ v


if __name__ == "__main__":
    key = jax.random.PRNGKey(0)
    k_x, k_wq, k_bq, k_wk, k_bk, k_wv, k_bv = jax.random.split(key, 7)

    B, T, C, H = 2, block_size, n_embd, head_size

    x = jax.random.normal(k_x, (B, T, C), dtype=jnp.float32)

    # nn.Linear default init: U(-1/sqrt(in), 1/sqrt(in)); weights stored as (in, out).
    bound = 1.0 / (C ** 0.5)
    wq = jax.random.uniform(k_wq, (C, H), jnp.float32, -bound, bound)
    bq = jax.random.uniform(k_bq, (1, H), jnp.float32, -bound, bound)
    wk = jax.random.uniform(k_wk, (C, H), jnp.float32, -bound, bound)
    bk = jax.random.uniform(k_bk, (1, H), jnp.float32, -bound, bound)
    wv = jax.random.uniform(k_wv, (C, H), jnp.float32, -bound, bound)
    bv = jax.random.uniform(k_bv, (1, H), jnp.float32, -bound, bound)

    # Fuse QKV params once at init (not in the per-forward path).
    wqkv, bqkv = fuse_qkv_params(wq, bq, wk, bk, wv, bv)

    out = head_forward(x, wqkv, bqkv)
    out = jax.block_until_ready(out)

    ref = head_reference(x, wq, bq, wk, bk, wv, bv)
    assert out.shape == (B, T, H)
    assert jnp.allclose(out, ref, atol=1e-3, rtol=1e-3), "mismatch vs reference"

    print("KERNEL_OK")
</pallas_src>

<mosaic_0001>
module attributes {stable_mosaic.version = 11 : i64} {
  func.func @head_kernel(%arg0: i32, %arg1: memref<2x8x32xf32, #tpu.memory_space<vmem>>, %arg2: memref<32x48xf32, #tpu.memory_space<vmem>>, %arg3: memref<1x48xf32, #tpu.memory_space<vmem>>, %arg4: memref<2x128xf32, #tpu.memory_space<vmem>>) attributes {dimension_semantics = [#tpu.dimension_semantics<parallel>], iteration_bounds = array<i64: 1>, scalar_prefetch = 0 : i64, scratch_operands = 0 : i64, tpu.core_type = #tpu.core_type<tc>, window_params = [{transform_indices = @transform_0, window_bounds = array<i64: 2, 8, 32>}, {pipeline_mode = #tpu.pipeline_mode<synchronous>, transform_indices = @transform_1, window_bounds = array<i64: 32, 48>}, {pipeline_mode = #tpu.pipeline_mode<synchronous>, transform_indices = @transform_2, window_bounds = array<i64: 1, 48>}, {transform_indices = @transform_3, window_bounds = array<i64: 2, 128>}]} {
    %c0 = arith.constant 0 : index
    %c0_0 = arith.constant 0 : index
    %c0_1 = arith.constant 0 : index
    %0 = vector.load %arg1[%c0, %c0_0, %c0_1] : memref<2x8x32xf32, #tpu.memory_space<vmem>>, vector<2x8x32xf32>
    %1 = vector.shape_cast %0 : vector<2x8x32xf32> to vector<16x32xf32>
    %c0_2 = arith.constant 0 : index
    %c0_3 = arith.constant 0 : index
    %2 = vector.load %arg2[%c0_2, %c0_3] : memref<32x48xf32, #tpu.memory_space<vmem>>, vector<32x48xf32>
    %cst = arith.constant dense<0.000000e+00> : vector<16x48xf32>
    %3 = tpu.matmul %1, %2, %cst {dimension_numbers = #tpu.dot_dimension_numbers<[1], [0], [0], [1], [0, 0, 1, 1], [], []>} : vector<16x32xf32>, vector<32x48xf32>, vector<16x48xf32> -> vector<16x48xf32>
    %c0_4 = arith.constant 0 : index
    %c0_5 = arith.constant 0 : index
    %4 = vector.load %arg3[%c0_4, %c0_5] : memref<1x48xf32, #tpu.memory_space<vmem>>, vector<1x48xf32>
    %5 = vector.broadcast %4 : vector<1x48xf32> to vector<16x48xf32>
    %6 = arith.addf %3, %5 : vector<16x48xf32>
    %7 = vector.shape_cast %6 : vector<16x48xf32> to vector<2x8x48xf32>
    %8 = vector.extract_strided_slice %7 {offsets = [0, 0, 0], sizes = [2, 8, 16], strides = [1, 1, 1]} : vector<2x8x48xf32> to vector<2x8x16xf32>
    %9 = vector.extract_strided_slice %7 {offsets = [0, 0, 16], sizes = [2, 8, 16], strides = [1, 1, 1]} : vector<2x8x48xf32> to vector<2x8x16xf32>
    %10 = vector.extract_strided_slice %7 {offsets = [0, 0, 32], sizes = [2, 8, 16], strides = [1, 1, 1]} : vector<2x8x48xf32> to vector<2x8x16xf32>
    %cst_6 = arith.constant 1.600000e+01 : f32
    %cst_7 = arith.constant -5.000000e-01 : f32
    %11 = math.powf %cst_6, %cst_7 : f32
    "tpu.trace_start"() <{level = 10 : i32, message = "btd,bsd->bts"}> : () -> ()
    %cst_8 = arith.constant dense<0.000000e+00> : vector<2x8x8xf32>
    %12 = tpu.matmul %8, %9, %cst_8 {dimension_numbers = #tpu.dot_dimension_numbers<[2], [2], [1], [1], [0, 0, 0, 1, 1, 1], [0], [0]>} : vector<2x8x16xf32>, vector<2x8x16xf32>, vector<2x8x8xf32> -> vector<2x8x8xf32>
    "tpu.trace_stop"() : () -> ()
    %13 = vector.broadcast %11 : f32 to vector<2x8x8xf32>
    %14 = arith.mulf %12, %13 : vector<2x8x8xf32>
    %15 = tpu.iota {dimensions = array<i32: 0>} : vector<8x8xi32>
    %16 = tpu.iota {dimensions = array<i32: 1>} : vector<8x8xi32>
    %17 = arith.cmpi sle, %16, %15 : vector<8x8xi32>
    %18 = vector.shape_cast %17 : vector<8x8xi1> to vector<1x8x8xi1>
    %cst_9 = arith.constant -1.000000e+30 : f32
    %19 = vector.shape_cast %18 : vector<1x8x8xi1> to vector<1x8x8xi1>
    %20 = vector.broadcast %19 : vector<1x8x8xi1> to vector<2x8x8xi1>
    %21 = vector.broadcast %cst_9 : f32 to vector<2x8x8xf32>
    %22 = arith.select %20, %14, %21 : vector<2x8x8xi1>, vector<2x8x8xf32>
    %cst_10 = arith.constant dense<0xFF800000> : vector<2x8xf32>
    %23 = vector.multi_reduction <maximumf>, %22, %cst_10 [2] : vector<2x8x8xf32> to vector<2x8xf32>
    %24 = vector.shape_cast %23 : vector<2x8xf32> to vector<2x8x1xf32>
    %25 = vector.broadcast %24 : vector<2x8x1xf32> to vector<2x8x8xf32>
    %26 = arith.subf %22, %25 : vector<2x8x8xf32>
    %27 = math.exp %26 : vector<2x8x8xf32>
    %cst_11 = arith.constant dense<0.000000e+00> : vector<2x8xf32>
    %28 = vector.multi_reduction <add>, %27, %cst_11 [2] : vector<2x8x8xf32> to vector<2x8xf32>
    %29 = vector.shape_cast %28 : vector<2x8xf32> to vector<2x8x1xf32>
    %30 = vector.broadcast %29 : vector<2x8x1xf32> to vector<2x8x8xf32>
    %31 = arith.divf %27, %30 : vector<2x8x8xf32>
    "tpu.trace_start"() <{level = 10 : i32, message = "bts,bsd->btd"}> : () -> ()
    %cst_12 = arith.constant dense<0.000000e+00> : vector<2x8x16xf32>
    %32 = tpu.matmul %31, %10, %cst_12 {dimension_numbers = #tpu.dot_dimension_numbers<[2], [1], [1], [2], [0, 0, 0, 1, 1, 2], [0], [0]>} : vector<2x8x8xf32>, vector<2x8x16xf32>, vector<2x8x16xf32> -> vector<2x8x16xf32>
    "tpu.trace_stop"() : () -> ()
    %33 = vector.shape_cast %32 : vector<2x8x16xf32> to vector<2x128xf32>
    %c0_13 = arith.constant 0 : index
    %c0_14 = arith.constant 0 : index
    %34 = vector.load %arg4[%c0_13, %c0_14] : memref<2x128xf32, #tpu.memory_space<vmem>>, vector<2x128xf32>
    tpu.vector_store %arg4[%c0_13, %c0_14], %33 {strides = array<i32>} : memref<2x128xf32, #tpu.memory_space<vmem>>, vector<2x128xf32>,
    return
  }
  func.func @transform_0(%arg0: i32) -> (i32, i32, i32) {
    %c0_i32 = arith.constant 0 : i32
    %c0_i32_0 = arith.constant 0 : i32
    %c0_i32_1 = arith.constant 0 : i32
    return %arg0, %c0_i32, %c0_i32_0 : i32, i32, i32
  }
  func.func @transform_1(%arg0: i32) -> (i32, i32) {
    %c0_i32 = arith.constant 0 : i32
    %c0_i32_0 = arith.constant 0 : i32
    %c0_i32_1 = arith.constant 0 : i32
    return %c0_i32, %c0_i32_0 : i32, i32
  }
  func.func @transform_2(%arg0: i32) -> (i32, i32) {
    %c0_i32 = arith.constant 0 : i32
    %c0_i32_0 = arith.constant 0 : i32
    %c0_i32_1 = arith.constant 0 : i32
    return %c0_i32, %c0_i32_0 : i32, i32
  }
  func.func @transform_3(%arg0: i32) -> (i32, i32) {
    %c0_i32 = arith.constant 0 : i32
    %c0_i32_0 = arith.constant 0 : i32
    return %arg0, %c0_i32 : i32, i32
  }
}

</mosaic_0001>

<llo_original>
// kernel: tpu_custom_call.1
$region0: #{tpu_custom_call.1}
  #allocation0 [shape = 'u32[]', space=smem, size = 0x4, offset = 0x4, fixed_abs, tag = 'smem constant byte address 0x4 - core index']
  #allocation1 [shape = 'u32[144,128]{1,0:T(1,128)}', space=vmem, size = 0x12000, scoped, tag = 'internal scratch']
  %s0 = inlined_call_operand.hbm [shape: f32[2,8,32], index: 0, kind: input, shape index: {}]
  %s1 = inlined_call_operand.hbm [shape: f32[32,48], index: 1, kind: input, shape index: {}]
  %s2 = inlined_call_operand.vmem [shape: f32[1,48], index: 2, kind: input, shape index: {}]
  %s3 = inlined_call_operand.hbm [shape: f32[2,128], index: 3, kind: output, shape index: {}]
  %s4 = sld [smem:[#allocation0]]
  $region30: #{tpu_custom_call.1} parent=0
    _
  %s6 = ssub.s32 1, %s4
  %s7 = scalar_select 0, %s6, %s4
  $region1: #{tpu_custom_call.1} parent=0
    #allocation2 [shape = 'u8[8192]{0}', space=vmem, size = 0x2000, scoped, tag = 'input window, operand 0, single buffered']
    #allocation3 [shape = 's32[1]{0}', space=sflag, size = 0x4, scoped, tag = 'scoped memory for tpu_custom_call.1']
    #allocation4 [shape = 's32[1]{0}', space=sflag, size = 0x4, scoped, tag = 'scoped memory for tpu_custom_call.1']
    #allocation5 [shape = 'u8[16384]{0}', space=vmem, size = 0x4000, scoped, tag = 'input window, operand 1, single buffered']
    #allocation6 [shape = 's32[1]{0}', space=sflag, size = 0x4, scoped, tag = 'scoped memory for tpu_custom_call.1']
    #allocation7 [shape = 'u8[1024]{0}', space=vmem, size = 0x400, scoped, tag = 'output window, operand 0, single buffered']
    %8 = vsyncpa [#allocation3], 0
    %9 = vsyncpa [#allocation6], 0
    %10 = vsyncpa [#allocation4], 0
    // Predicated region
    $region2: #{tpu_custom_call.1} parent=1 // pred_check
      _
    $region3: #{tpu_custom_call.1} parent=1 // pred_check_branch
      %12 = sbr.rel (0) target = $region5
    $region4: #{tpu_custom_call.1} parent=1 // pred_region
      %s14 = ssub.s32 256, 256
      %15 = vsyncadd [#allocation3], %s14
      %s16 = sshll.u32 [#allocation2], 4
      %s17 = int_to_ptr.vmem [resolvable:$true] %s16
      %22 = dma.hbm_to_vmem [thread:$0]  %s0, 256, %s17, [#allocation3], 128, 128, 8
    $region5: #{tpu_custom_call.1} parent=1 // pred_fallthru
      _
    // Predicated region
    $region6: #{tpu_custom_call.1} parent=1 // pred_check
      _
    $region7: #{tpu_custom_call.1} parent=1 // pred_check_branch
      %24 = sbr.rel (0) target = $region9
    $region8: #{tpu_custom_call.1} parent=1 // pred_region
      %s26 = ssub.s32 512, 512
      %27 = vsyncadd [#allocation6], %s26
      %s28 = sshll.u32 [#allocation5], 4
      %s29 = int_to_ptr.vmem [resolvable:$true] %s28
      %34 = dma.hbm_to_vmem [thread:$0]  %s1, 512, %s29, [#allocation6], 128, 128, 8
    $region9: #{tpu_custom_call.1} parent=1 // pred_fallthru
      _
    // Predicated region
    $region10: #{tpu_custom_call.1} parent=1 // pred_check
      _
    $region11: #{tpu_custom_call.1} parent=1 // pred_check_branch
      %36 = sbr.rel (0) target = $region13
    $region12: #{tpu_custom_call.1} parent=1 // pred_region
      _
    $region13: #{tpu_custom_call.1} parent=1 // pred_fallthru
      _
    // Predicated region
    $region14: #{tpu_custom_call.1} parent=1 // pred_check
      _
    $region15: #{tpu_custom_call.1} parent=1 // pred_check_branch
      %38 = sbr.rel (0) target = $region17
    $region16: #{tpu_custom_call.1} parent=1 // pred_region
      %39 = dma.done [#allocation3], 256
    $region17: #{tpu_custom_call.1} parent=1 // pred_fallthru
      _
    // Predicated region
    $region18: #{tpu_custom_call.1} parent=1 // pred_check
      _
    $region19: #{tpu_custom_call.1} parent=1 // pred_check_branch
      %41 = sbr.rel (0) target = $region21
    $region20: #{tpu_custom_call.1} parent=1 // pred_region
      %42 = dma.done [#allocation6], 512
    $region21: #{tpu_custom_call.1} parent=1 // pred_fallthru
      _
    %v43 = vld [vmem:[#allocation2] sm:$0xff]
    %v44 = vld [vmem:[#allocation2 + $0x8] sm:$0xff]
    %v45 = vld [vmem:[#allocation5] sm:$0xff]
    %v46 = vld [vmem:[#allocation5 + $0x8] sm:$0xff]
    %v47 = vld [vmem:[#allocation5 + $0x10] sm:$0xff]
    %v48 = vld [vmem:[#allocation5 + $0x18] sm:$0xff]
    %v49 = vld [vmem:[%s2] sm:$0x1]
    %v51 = vlaneseq
    %v52 = vshrl.u32 %v51, 7
    %v53 = vsub.s32 0, %v52
    %v54 = vrot.slane %v49, %v53
    %vm56 = vcmask 261120
    %v58 = vsel %vm56, %v43, 0
    %v61 = vsel %vm56, %v44, 0
    %63 = vmatprep.subr.mxu0 0.0
    %64 = vmatpush1.msra.mxu0 %v45
    %65 = vmatprep.subr.mxu0 0.0
    %66 = vmatpush1.msra.mxu0 %v46
    %67 = vmatprep.subr.mxu0 0.0
    %68 = vmatpush1.msra.mxu0 %v47
    %69 = vmatprep.subr.mxu0 0.0
    %70 = vmatpush1.msra.mxu0 %v48
    %71 = vmatprep.subr.mxu0 0.0
    %72 = vmatpush1.msra.mxu0 0.0
    %73 = vmatprep.subr.mxu0 0.0
    %74 = vmatpush1.msra.mxu0 0.0
    %75 = vmatprep.subr.mxu0 0.0
    %76 = vmatpush1.msra.mxu0 0.0
    %77 = vmatprep.subr.mxu0 0.0
    %78 = vmatpush1.msra.mxu0 0.0
    %79 = vmatprep.subr.mxu0 0.0
    %80 = vmatpush1.msra.mxu0 0.0
    %81 = vmatprep.subr.mxu0 0.0
    %82 = vmatpush1.msra.mxu0 0.0
    %83 = vmatprep.subr.mxu0 0.0
    %84 = vmatpush1.msra.mxu0 0.0
    %85 = vmatprep.subr.mxu0 0.0
    %86 = vmatpush1.msra.mxu0 0.0
    %87 = vmatprep.subr.mxu0 0.0
    %88 = vmatpush1.msra.mxu0 0.0
    %89 = vmatprep.subr.mxu0 0.0
    %90 = vmatpush1.msra.mxu0 0.0
    %91 = vmatprep.subr.mxu0 0.0
    %92 = vmatpush1.msra.mxu0 0.0
    %93 = vmatprep.subr.mxu0 0.0
    %94 = vmatpush1.msra.mxu0 0.0
    %95 = vmatprep.subr.mxu0 0.0
    %96 = vmatpush1.msra.mxu0 0.0
    %97 = vmatprep.subr.mxu0 0.0
    %98 = vmatpush1.msra.mxu0 0.0
    %99 = vmatprep.subr.mxu0 0.0
    %100 = vmatpush1.msra.mxu0 0.0
    %101 = vmatprep.subr.mxu0 0.0
    %102 = vmatpush1.msra.mxu0 0.0
    %103 = vmatprep.subr.mxu0 0.0
    %104 = vmatpush1.msra.mxu0 0.0
    %105 = vmatprep.subr.mxu0 0.0
    %106 = vmatpush1.msra.mxu0 0.0
    %107 = vmatprep.subr.mxu0 0.0
    %108 = vmatpush1.msra.mxu0 0.0
    %109 = vmatprep.subr.mxu0 0.0
    %110 = vmatpush1.msra.mxu0 0.0
    %111 = vmatprep.subr.mxu0 0.0
    %112 = vmatpush1.msra.mxu0 0.0
    %113 = vmatprep.subr.mxu0 0.0
    %114 = vmatpush1.msra.mxu0 0.0
    %115 = vmatprep.subr.mxu0 0.0
    %116 = vmatpush1.msra.mxu0 0.0
    %117 = vmatprep.subr.mxu0 0.0
    %118 = vmatpush1.msra.mxu0 0.0
    %119 = vmatprep.subr.mxu0 0.0
    %120 = vmatpush1.msra.mxu0 0.0
    %121 = vmatprep.subr.mxu0 0.0
    %122 = vmatpush1.msra.mxu0 0.0
    %123 = vmatprep.subr.mxu0 0.0
    %124 = vmatpush1.msra.mxu0 0.0
    %125 = vmatprep.subr.mxu0 0.0
    %126 = vmatpush1.msra.mxu0 0.0
    %127 = vmatprep.mubr.f32.mxu0 0.0
    %128 = vmatmul.mubr.f32.gmra.mrb[0].mxu0 %v58
    %v129 = vpop.f32.mrb[0].mxu0
    %v130 = vadd.f32 %v54, %v129
    %v131 = vpop.f32.mrb[0].mxu0
    %132 = vmatprep.mubr.f32.mxu0 0.0
    %133 = vmatmul.mubr.f32.gmra.mrb[0].mxu0 %v61
    %v134 = vpop.f32.mrb[0].mxu0
    %v135 = vadd.f32 %v54, %v134
    %v136 = vpop.f32.mrb[0].mxu0
    %137 = vdwg.mxu0
    %139 = vrot.lane.b32.xlu0 %v130, 112
    %v140 = vpop.permute.xlu0 %139
    %vm141 = vcmask 130048
    %v142 = vsel %vm141, %v130, 0
    %v144 = vsel %vm141, %v140, 0
    %146 = vmatprep.subr.mxu0 0.0
    %147 = vmatpush1.xpose.msra.mxu0 %v144
    %148 = vmatprep.subr.mxu0 0.0
    %149 = vmatpush1.xpose.msra.mxu0 0.0
    %150 = vmatprep.subr.mxu0 0.0
    %151 = vmatpush1.xpose.msra.mxu0 0.0
    %152 = vmatprep.subr.mxu0 0.0
    %153 = vmatpush1.xpose.msra.mxu0 0.0
    %154 = vmatprep.subr.mxu0 0.0
    %155 = vmatpush1.xpose.msra.mxu0 0.0
    %156 = vmatprep.subr.mxu0 0.0
    %157 = vmatpush1.xpose.msra.mxu0 0.0
    %158 = vmatprep.subr.mxu0 0.0
    %159 = vmatpush1.xpose.msra.mxu0 0.0
    %160 = vmatprep.subr.mxu0 0.0
    %161 = vmatpush1.xpose.msra.mxu0 0.0
    %162 = vmatprep.subr.mxu0 0.0
    %163 = vmatpush1.xpose.msra.mxu0 0.0
    %164 = vmatprep.subr.mxu0 0.0
    %165 = vmatpush1.xpose.msra.mxu0 0.0
    %166 = vmatprep.subr.mxu0 0.0
    %167 = vmatpush1.xpose.msra.mxu0 0.0
    %168 = vmatprep.subr.mxu0 0.0
    %169 = vmatpush1.xpose.msra.mxu0 0.0
    %170 = vmatprep.subr.mxu0 0.0
    %171 = vmatpush1.xpose.msra.mxu0 0.0
    %172 = vmatprep.subr.mxu0 0.0
    %173 = vmatpush1.xpose.msra.mxu0 0.0
    %174 = vmatprep.subr.mxu0 0.0
    %175 = vmatpush1.xpose.msra.mxu0 0.0
    %176 = vmatprep.subr.mxu0 0.0
    %177 = vmatpush1.xpose.msra.mxu0 0.0
    %178 = vmatprep.subr.mxu0 0.0
    %179 = vmatpush1.xpose.msra.mxu0 0.0
    %180 = vmatprep.subr.mxu0 0.0
    %181 = vmatpush1.xpose.msra.mxu0 0.0
    %182 = vmatprep.subr.mxu0 0.0
    %183 = vmatpush1.xpose.msra.mxu0 0.0
    %184 = vmatprep.subr.mxu0 0.0
    %185 = vmatpush1.xpose.msra.mxu0 0.0
    %186 = vmatprep.subr.mxu0 0.0
    %187 = vmatpush1.xpose.msra.mxu0 0.0
    %188 = vmatprep.subr.mxu0 0.0
    %189 = vmatpush1.xpose.msra.mxu0 0.0
    %190 = vmatprep.subr.mxu0 0.0
    %191 = vmatpush1.xpose.msra.mxu0 0.0
    %192 = vmatprep.subr.mxu0 0.0
    %193 = vmatpush1.xpose.msra.mxu0 0.0
    %194 = vmatprep.subr.mxu0 0.0
    %195 = vmatpush1.xpose.msra.mxu0 0.0
    %196 = vmatprep.subr.mxu0 0.0
    %197 = vmatpush1.xpose.msra.mxu0 0.0
    %198 = vmatprep.subr.mxu0 0.0
    %199 = vmatpush1.xpose.msra.mxu0 0.0
    %200 = vmatprep.subr.mxu0 0.0
    %201 = vmatpush1.xpose.msra.mxu0 0.0
    %202 = vmatprep.subr.mxu0 0.0
    %203 = vmatpush1.xpose.msra.mxu0 0.0
    %204 = vmatprep.subr.mxu0 0.0
    %205 = vmatpush1.xpose.msra.mxu0 0.0
    %206 = vmatprep.subr.mxu0 0.0
    %207 = vmatpush1.xpose.msra.mxu0 0.0
    %208 = vmatprep.subr.mxu0 0.0
    %209 = vmatpush1.xpose.msra.mxu0 0.0
    %210 = vmatprep.mubr.f32.mxu0 0.0
    %211 = vmatmul.mubr.f32.gmra.mrb[0].mxu0 %v142
    %v212 = vpop.f32.mrb[0].mxu0
    %v213 = vadd.f32 0.0, %v212
    %v214 = vpop.f32.mrb[0].mxu0
    %215 = vdwg.mxu0
    %217 = vrot.lane.b32.xlu0 %v135, 112
    %v218 = vpop.permute.xlu0 %217
    %v219 = vsel %vm141, %v135, 0
    %v221 = vsel %vm141, %v218, 0
    %223 = vmatprep.subr.mxu0 0.0
    %224 = vmatpush1.xpose.msra.mxu0 %v221
    %225 = vmatprep.subr.mxu0 0.0
    %226 = vmatpush1.xpose.msra.mxu0 0.0
    %227 = vmatprep.subr.mxu0 0.0
    %228 = vmatpush1.xpose.msra.mxu0 0.0
    %229 = vmatprep.subr.mxu0 0.0
    %230 = vmatpush1.xpose.msra.mxu0 0.0
    %231 = vmatprep.subr.mxu0 0.0
    %232 = vmatpush1.xpose.msra.mxu0 0.0
    %233 = vmatprep.subr.mxu0 0.0
    %234 = vmatpush1.xpose.msra.mxu0 0.0
    %235 = vmatprep.subr.mxu0 0.0
    %236 = vmatpush1.xpose.msra.mxu0 0.0
    %237 = vmatprep.subr.mxu0 0.0
    %238 = vmatpush1.xpose.msra.mxu0 0.0
    %239 = vmatprep.subr.mxu0 0.0
    %240 = vmatpush1.xpose.msra.mxu0 0.0
    %241 = vmatprep.subr.mxu0 0.0
    %242 = vmatpush1.xpose.msra.mxu0 0.0
    %243 = vmatprep.subr.mxu0 0.0
    %244 = vmatpush1.xpose.msra.mxu0 0.0
    %245 = vmatprep.subr.mxu0 0.0
    %246 = vmatpush1.xpose.msra.mxu0 0.0
    %247 = vmatprep.subr.mxu0 0.0
    %248 = vmatpush1.xpose.msra.mxu0 0.0
    %249 = vmatprep.subr.mxu0 0.0
    %250 = vmatpush1.xpose.msra.mxu0 0.0
    %251 = vmatprep.subr.mxu0 0.0
    %252 = vmatpush1.xpose.msra.mxu0 0.0
    %253 = vmatprep.subr.mxu0 0.0
    %254 = vmatpush1.xpose.msra.mxu0 0.0
    %255 = vmatprep.subr.mxu0 0.0
    %256 = vmatpush1.xpose.msra.mxu0 0.0
    %257 = vmatprep.subr.mxu0 0.0
    %258 = vmatpush1.xpose.msra.mxu0 0.0
    %259 = vmatprep.subr.mxu0 0.0
    %260 = vmatpush1.xpose.msra.mxu0 0.0
    %261 = vmatprep.subr.mxu0 0.0
    %262 = vmatpush1.xpose.msra.mxu0 0.0
    %263 = vmatprep.subr.mxu0 0.0
    %264 = vmatpush1.xpose.msra.mxu0 0.0
    %265 = vmatprep.subr.mxu0 0.0
    %266 = vmatpush1.xpose.msra.mxu0 0.0
    %267 = vmatprep.subr.mxu0 0.0
    %268 = vmatpush1.xpose.msra.mxu0 0.0
    %269 = vmatprep.subr.mxu0 0.0
    %270 = vmatpush1.xpose.msra.mxu0 0.0
    %271 = vmatprep.subr.mxu0 0.0
    %272 = vmatpush1.xpose.msra.mxu0 0.0
    %273 = vmatprep.subr.mxu0 0.0
    %274 = vmatpush1.xpose.msra.mxu0 0.0
    %275 = vmatprep.subr.mxu0 0.0
    %276 = vmatpush1.xpose.msra.mxu0 0.0
    %277 = vmatprep.subr.mxu0 0.0
    %278 = vmatpush1.xpose.msra.mxu0 0.0
    %279 = vmatprep.subr.mxu0 0.0
    %280 = vmatpush1.xpose.msra.mxu0 0.0
    %281 = vmatprep.subr.mxu0 0.0
    %282 = vmatpush1.xpose.msra.mxu0 0.0
    %283 = vmatprep.subr.mxu0 0.0
    %284 = vmatpush1.xpose.msra.mxu0 0.0
    %285 = vmatprep.subr.mxu0 0.0
    %286 = vmatpush1.xpose.msra.mxu0 0.0
    %287 = vmatprep.mubr.f32.mxu0 0.0
    %288 = vmatmul.mubr.f32.gmra.mrb[0].mxu0 %v219
    %v289 = vpop.f32.mrb[0].mxu0
    %v290 = vadd.f32 0.0, %v289
    %v291 = vpop.f32.mrb[0].mxu0
    %292 = vdwg.mxu0
    %v293 = vmul.f32 %v213, 0.25
    %v294 = vmul.f32 %v290, 0.25
    %v295 = vlaneseq
    %v296 = vshrl.u32 %v295, 7
    %v297 = vlaneseq
    %v298 = vand.u32 %v297, 127
    %vm299 = vcmp.le.s32.totalorder %v298, %v296
    %v300 = vsel %vm299, 1, 0
    %vm301 = vcmp.eq.s32.totalorder %v300, 1
    %v302 = vsel %vm301, %v293, -1e+30
    %v303 = vsel %vm301, %v294, -1e+30
    %vm304 = vcmask 64512
    %v305 = vsel %vm304, %v302, -inf
    %306 = vmax.xlane.f32.xlu0 %v305
    %v307 = vpop.xlane.xlu0 %306
    %v308 = vsel %vm304, %v303, -inf
    %309 = vmax.xlane.f32.xlu0 %v308
    %v310 = vpop.xlane.xlu0 %309
    %v311 = vsub.f32 %v302, %v307
    %v312 = vsub.f32 %v303, %v310
    %v313 = vmul.f32 %v311, 1.442695
    %v314 = vpow.pop %v313
    %v315 = vmul.f32 %v312, 1.442695
    %v316 = vpow.pop %v315
    %v317 = vsel %vm304, %v314, 0.0
    %318 = vadd.xlane.f32.xlu0 %v317
    %v319 = vpop.xlane.xlu0 %318
    %v320 = vsel %vm304, %v316, 0.0
    %321 = vadd.xlane.f32.xlu0 %v320
    %v322 = vpop.xlane.xlu0 %321
    %v323 = vrcp.pop %v319
    %v324 = vmul.f32 %v314, %v323
    %v325 = vrcp.pop %v322
    %v326 = vmul.f32 %v316, %v325
    %327 = vrot.lane.b32.xlu0 %v130, 96
    %v328 = vpop.permute.xlu0 %327
    %v331 = vsel %vm304, %v324, 0
    %333 = vmatprep.subr.mxu0 0.0
    %334 = vmatpush1.msra.mxu0 %v328
    %335 = vmatprep.subr.mxu0 0.0
    %336 = vmatpush1.msra.mxu0 0.0
    %337 = vmatprep.subr.mxu0 0.0
    %338 = vmatpush1.msra.mxu0 0.0
    %339 = vmatprep.subr.mxu0 0.0
    %340 = vmatpush1.msra.mxu0 0.0
    %341 = vmatprep.subr.mxu0 0.0
    %342 = vmatpush1.msra.mxu0 0.0
    %343 = vmatprep.subr.mxu0 0.0
    %344 = vmatpush1.msra.mxu0 0.0
    %345 = vmatprep.subr.mxu0 0.0
    %346 = vmatpush1.msra.mxu0 0.0
    %347 = vmatprep.subr.mxu0 0.0
    %348 = vmatpush1.msra.mxu0 0.0
    %349 = vmatprep.subr.mxu0 0.0
    %350 = vmatpush1.msra.mxu0 0.0
    %351 = vmatprep.subr.mxu0 0.0
    %352 = vmatpush1.msra.mxu0 0.0
    %353 = vmatprep.subr.mxu0 0.0
    %354 = vmatpush1.msra.mxu0 0.0
    %355 = vmatprep.subr.mxu0 0.0
    %356 = vmatpush1.msra.mxu0 0.0
    %357 = vmatprep.subr.mxu0 0.0
    %358 = vmatpush1.msra.mxu0 0.0
    %359 = vmatprep.subr.mxu0 0.0
    %360 = vmatpush1.msra.mxu0 0.0
    %361 = vmatprep.subr.mxu0 0.0
    %362 = vmatpush1.msra.mxu0 0.0
    %363 = vmatprep.subr.mxu0 0.0
    %364 = vmatpush1.msra.mxu0 0.0
    %365 = vmatprep.subr.mxu0 0.0
    %366 = vmatpush1.msra.mxu0 0.0
    %367 = vmatprep.subr.mxu0 0.0
    %368 = vmatpush1.msra.mxu0 0.0
    %369 = vmatprep.subr.mxu0 0.0
    %370 = vmatpush1.msra.mxu0 0.0
    %371 = vmatprep.subr.mxu0 0.0
    %372 = vmatpush1.msra.mxu0 0.0
    %373 = vmatprep.subr.mxu0 0.0
    %374 = vmatpush1.msra.mxu0 0.0
    %375 = vmatprep.subr.mxu0 0.0
    %376 = vmatpush1.msra.mxu0 0.0
    %377 = vmatprep.subr.mxu0 0.0
    %378 = vmatpush1.msra.mxu0 0.0
    %379 = vmatprep.subr.mxu0 0.0
    %380 = vmatpush1.msra.mxu0 0.0
    %381 = vmatprep.subr.mxu0 0.0
    %382 = vmatpush1.msra.mxu0 0.0
    %383 = vmatprep.subr.mxu0 0.0
    %384 = vmatpush1.msra.mxu0 0.0
    %385 = vmatprep.subr.mxu0 0.0
    %386 = vmatpush1.msra.mxu0 0.0
    %387 = vmatprep.subr.mxu0 0.0
    %388 = vmatpush1.msra.mxu0 0.0
    %389 = vmatprep.subr.mxu0 0.0
    %390 = vmatpush1.msra.mxu0 0.0
    %391 = vmatprep.subr.mxu0 0.0
    %392 = vmatpush1.msra.mxu0 0.0
    %393 = vmatprep.subr.mxu0 0.0
    %394 = vmatpush1.msra.mxu0 0.0
    %395 = vmatprep.subr.mxu0 0.0
    %396 = vmatpush1.msra.mxu0 0.0
    %397 = vmatprep.mubr.f32.mxu0 0.0
    %398 = vmatmul.mubr.f32.gmra.mrb[0].mxu0 %v331
    %v399 = vpop.f32.mrb[0].mxu0
    %v400 = vadd.f32 0.0, %v399
    %v401 = vpop.f32.mrb[0].mxu0
    %402 = vdwg.mxu0
    %403 = vrot.lane.b32.xlu0 %v135, 96
    %v404 = vpop.permute.xlu0 %403
    %v407 = vsel %vm304, %v326, 0
    %409 = vmatprep.subr.mxu0 0.0
    %410 = vmatpush1.msra.mxu0 %v404
    %411 = vmatprep.subr.mxu0 0.0
    %412 = vmatpush1.msra.mxu0 0.0
    %413 = vmatprep.subr.mxu0 0.0
    %414 = vmatpush1.msra.mxu0 0.0
    %415 = vmatprep.subr.mxu0 0.0
    %416 = vmatpush1.msra.mxu0 0.0
    %417 = vmatprep.subr.mxu0 0.0
    %418 = vmatpush1.msra.mxu0 0.0
    %419 = vmatprep.subr.mxu0 0.0
    %420 = vmatpush1.msra.mxu0 0.0
    %421 = vmatprep.subr.mxu0 0.0
    %422 = vmatpush1.msra.mxu0 0.0
    %423 = vmatprep.subr.mxu0 0.0
    %424 = vmatpush1.msra.mxu0 0.0
    %425 = vmatprep.subr.mxu0 0.0
    %426 = vmatpush1.msra.mxu0 0.0
    %427 = vmatprep.subr.mxu0 0.0
    %428 = vmatpush1.msra.mxu0 0.0
    %429 = vmatprep.subr.mxu0 0.0
    %430 = vmatpush1.msra.mxu0 0.0
    %431 = vmatprep.subr.mxu0 0.0
    %432 = vmatpush1.msra.mxu0 0.0
    %433 = vmatprep.subr.mxu0 0.0
    %434 = vmatpush1.msra.mxu0 0.0
    %435 = vmatprep.subr.mxu0 0.0
    %436 = vmatpush1.msra.mxu0 0.0
    %437 = vmatprep.subr.mxu0 0.0
    %438 = vmatpush1.msra.mxu0 0.0
    %439 = vmatprep.subr.mxu0 0.0
    %440 = vmatpush1.msra.mxu0 0.0
    %441 = vmatprep.subr.mxu0 0.0
    %442 = vmatpush1.msra.mxu0 0.0
    %443 = vmatprep.subr.mxu0 0.0
    %444 = vmatpush1.msra.mxu0 0.0
    %445 = vmatprep.subr.mxu0 0.0
    %446 = vmatpush1.msra.mxu0 0.0
    %447 = vmatprep.subr.mxu0 0.0
    %448 = vmatpush1.msra.mxu0 0.0
    %449 = vmatprep.subr.mxu0 0.0
    %450 = vmatpush1.msra.mxu0 0.0
    %451 = vmatprep.subr.mxu0 0.0
    %452 = vmatpush1.msra.mxu0 0.0
    %453 = vmatprep.subr.mxu0 0.0
    %454 = vmatpush1.msra.mxu0 0.0
    %455 = vmatprep.subr.mxu0 0.0
    %456 = vmatpush1.msra.mxu0 0.0
    %457 = vmatprep.subr.mxu0 0.0
    %458 = vmatpush1.msra.mxu0 0.0
    %459 = vmatprep.subr.mxu0 0.0
    %460 = vmatpush1.msra.mxu0 0.0
    %461 = vmatprep.subr.mxu0 0.0
    %462 = vmatpush1.msra.mxu0 0.0
    %463 = vmatprep.subr.mxu0 0.0
    %464 = vmatpush1.msra.mxu0 0.0
    %465 = vmatprep.subr.mxu0 0.0
    %466 = vmatpush1.msra.mxu0 0.0
    %467 = vmatprep.subr.mxu0 0.0
    %468 = vmatpush1.msra.mxu0 0.0
    %469 = vmatprep.subr.mxu0 0.0
    %470 = vmatpush1.msra.mxu0 0.0
    %471 = vmatprep.subr.mxu0 0.0
    %472 = vmatpush1.msra.mxu0 0.0
    %473 = vmatprep.mubr.f32.mxu0 0.0
    %474 = vmatmul.mubr.f32.gmra.mrb[0].mxu0 %v407
    %v475 = vpop.f32.mrb[0].mxu0
    %v476 = vadd.f32 0.0, %v475
    %v477 = vpop.f32.mrb[0].mxu0
    %478 = vdwg.mxu0
    %v479 = vcombine.high %v400, 0.0
    %v481 = vunpack.c.l.s4 1983009808
    %v482 = vunpack.c.0.s8 %v481
    %v483 = vlaneseq
    %v484 = vshrl.u32 %v483, 7
    %v485 = vsub.s32 %v482, %v484
    %v486 = vrot.slane %v400, %v485
    %v488 = vunpack.c.l.s4 1983009808
    %v489 = vunpack.c.0.s8 %v488
    %v490 = vlaneseq
    %v491 = vshrl.u32 %v490, 7
    %v492 = vsub.s32 %v489, %v491
    %v493 = vrot.slane %v479, %v492
    %v494 = vcombine.high %v476, 0.0
    %v496 = vunpack.c.l.s4 1983009808
    %v497 = vunpack.c.0.s8 %v496
    %v498 = vlaneseq
    %v499 = vshrl.u32 %v498, 7
    %v500 = vsub.s32 %v497, %v499
    %v501 = vrot.slane %v476, %v500
    %v503 = vunpack.c.l.s4 1983009808
    %v504 = vunpack.c.0.s8 %v503
    %v505 = vlaneseq
    %v506 = vshrl.u32 %v505, 7
    %v507 = vsub.s32 %v504, %v506
    %v508 = vrot.slane %v494, %v507
    %v509 = vcombine.low %v486, %v501
    %v510 = vcombine.high %v486, %v501
    %v512 = vunpack.c.l.s4 1934713408
    %v513 = vunpack.c.0.s8 %v512
    %v514 = vlaneseq
    %v515 = vshrl.u32 %v514, 7
    %v516 = vsub.s32 %v513, %v515
    %v517 = vrot.slane %v509, %v516
    %v519 = vunpack.c.l.s4 1934713408
    %v520 = vunpack.c.0.s8 %v519
    %v521 = vlaneseq
    %v522 = vshrl.u32 %v521, 7
    %v523 = vsub.s32 %v520, %v522
    %v524 = vrot.slane %v510, %v523
    %v525 = vcombine.low %v493, %v508
    %v526 = vcombine.high %v493, %v508
    %v528 = vunpack.c.l.s4 1934713408
    %v529 = vunpack.c.0.s8 %v528
    %v530 = vlaneseq
    %v531 = vshrl.u32 %v530, 7
    %v532 = vsub.s32 %v529, %v531
    %v533 = vrot.slane %v525, %v532
    %v535 = vunpack.c.l.s4 1934713408
    %v536 = vunpack.c.0.s8 %v535
    %v537 = vlaneseq
    %v538 = vshrl.u32 %v537, 7
    %v539 = vsub.s32 %v536, %v538
    %v540 = vrot.slane %v526, %v539
    %v541 = vcombine.high %v517, 0.0
    %v542 = vcombine.high %v524, 0.0
    %v543 = vcombine.high %v533, 0.0
    %v544 = vcombine.high %v540, 0.0
    %546 = vrot.lane.b32.xlu0 %v541, 16
    %v547 = vpop.permute.xlu0 %546
    %550 = vrot.lane.b32.xlu0 %v524, 32
    %v551 = vpop.permute.xlu0 %550
    %554 = vrot.lane.b32.xlu0 %v542, 48
    %v555 = vpop.permute.xlu0 %554
    %558 = vrot.lane.b32.xlu0 %v533, 64
    %v559 = vpop.permute.xlu0 %558
    %562 = vrot.lane.b32.xlu0 %v543, 80
    %v563 = vpop.permute.xlu0 %562
    %566 = vrot.lane.b32.xlu0 %v540, 96
    %v567 = vpop.permute.xlu0 %566
    %570 = vrot.lane.b32.xlu0 %v544, 112
    %v571 = vpop.permute.xlu0 %570
    %v573 = vsel %vm141, %v517, %v547
    %v574 = vsel %vm56, %v573, %v551
    %vm575 = vcmask 392192
    %v576 = vsel %vm575, %v574, %v555
    %vm577 = vcmask 523264
    %v578 = vsel %vm577, %v576, %v559
    %vm579 = vcmask 654336
    %v580 = vsel %vm579, %v578, %v563
    %vm581 = vcmask 785408
    %v582 = vsel %vm581, %v580, %v567
    %vm583 = vcmask 916480
    %v584 = vsel %vm583, %v582, %v571
    %585 = vst [vmem:[#allocation7] sm:$0x3] %v584
    // Predicated region
    $region22: #{tpu_custom_call.1} parent=1 // pred_check
      _
    $region23: #{tpu_custom_call.1} parent=1 // pred_check_branch
      %587 = sbr.rel (0) target = $region25
    $region24: #{tpu_custom_call.1} parent=1 // pred_region
      %s589 = ssub.s32 32, 32
      %590 = vsyncadd [#allocation4], %s589
      %s592 = sshll.u32 [#allocation7], 4
      %s593 = int_to_ptr.vmem [resolvable:$true] %s592
      %595 = dma.vmem_to_hbm [thread:$0]  %s593, 32, %s3, [#allocation4]
    $region25: #{tpu_custom_call.1} parent=1 // pred_fallthru
      _
    // Predicated region
    $region26: #{tpu_custom_call.1} parent=1 // pred_check
      _
    $region27: #{tpu_custom_call.1} parent=1 // pred_check_branch
      %597 = sbr.rel (0) target = $region29
    $region28: #{tpu_custom_call.1} parent=1 // pred_region
      %598 = dma.done [#allocation4], 32
    $region29: #{tpu_custom_call.1} parent=1 // pred_fallthru
      _
    %599 = vsyncpa [#allocation3], 1
    %600 = vsyncpa [#allocation6], 1
    %601 = vsyncpa [#allocation4], 1

</llo_original>
